<compile_context>
chip_gen: v7x
topology: tpu7x:2x2x1
jax: 0.10.0
libtpu: 0.0.40
codegen_flags: <defaults>
</compile_context>

<pallas_src>
import functools

import jax
import jax.numpy as jnp
from jax.experimental import pallas as pl
from jax.experimental.pallas import tpu as pltpu


_TARGET_BLOCK_BYTES = 2 * 1024 * 1024          # 1-8 MiB sweet spot (>=85% HBM roofline)
_SINGLE_PASS_MAX_PER_BATCH = 4 * 1024 * 1024   # fused path only when per-batch is small


# --------------------------------------------------------------------------- #
# Kernels
# --------------------------------------------------------------------------- #
def _sca3d_fused_kernel(x_ref, w1_ref, b1_ref, w2_ref, b2_ref, wspa_ref, o_ref,
                        *, inv_s):
    """Single-pass: block = (TB, C, S).  Pool + SE-MLP + spatial gate + combine.

    The SE-MLP and the 1xC spatial reduction stay on the VPU/XLU on purpose:
    M=1 / N=1 MXU matmuls would waste the systolic array and pay drain latency.
    """
    x = x_ref[...].astype(jnp.float32)                         # (TB, C, S)

    # Global average pool over the true spatial size (no padding anywhere).
    pooled = jnp.sum(x, axis=-1) * inv_s                       # (TB, C)

    # Tiny SE-MLP (VPU + lane reduce).
    z1 = jnp.sum(pooled[:, None, :] * w1_ref[...][None, :, :], axis=-1) + b1_ref[...]
    z1 = jnp.maximum(z1, 0.0)                                  # (TB, Hid)
    z2 = jnp.sum(z1[:, None, :] * w2_ref[...][None, :, :], axis=-1) + b2_ref[...]
    chn_gate = jax.nn.sigmoid(z2)[:, :, None]                  # (TB, C, 1)

    # Spatial squeeze (1x1x1 conv C->1, no bias): per-lane channel reduce.
    s_lin = jnp.sum(x * wspa_ref[...][None, :, :], axis=1, keepdims=True)
    spa_gate = jax.nn.sigmoid(s_lin)                           # (TB, 1, S)

    o_ref[...] = (x * (1.0 + spa_gate + chn_gate)).astype(o_ref.dtype)


def _sca3d_combine_kernel(x_ref, chn_ref, wspa_ref, o_ref):
    """Two-pass main kernel: block = (1, C, TS); chn_gate precomputed.

    Exactly two VMEM passes over the x tile (channel reduce for the spatial
    gate, then the combine) - the minimum, since spa_gate needs the full
    channel sum per spatial position before the multiply.
    """
    x = x_ref[...].astype(jnp.float32)                         # (1, C, TS)
    chn_gate = chn_ref[...].astype(jnp.float32)                # (1, C, 1), already sigmoided
    s_lin = jnp.sum(x * wspa_ref[...][None, :, :], axis=1, keepdims=True)
    spa_gate = jax.nn.sigmoid(s_lin)                           # (1, 1, TS)
    o_ref[...] = (x * (1.0 + spa_gate + chn_gate)).astype(o_ref.dtype)


# --------------------------------------------------------------------------- #
# Tiling / VMEM heuristics
# --------------------------------------------------------------------------- #
def _vmem_capacity_bytes():
    try:
        return int(pltpu.get_tpu_info().vmem_capacity_bytes)
    except Exception:
        return 64 * 1024 * 1024        # conservative: v7x per-TensorCore VMEM


def _vmem_budget():
    # Scoped limit ~3/4 of physical: ~48 MiB on v7x, ~96 MiB on v5e/v6e.
    return (_vmem_capacity_bytes() * 3) // 4


def _vmem_limit(block_bytes, extra_bytes):
    # in + out double-buffered (4x) + ~1 block of materialized elementwise
    # temporaries + weights + a couple of MiB headroom, capped at the budget.
    needed = 5 * block_bytes + extra_bytes + 2 * 1024 * 1024
    return int(max(16 * 1024 * 1024, min(needed, _vmem_budget())))


def _pick_batch_tile(B, per_batch_bytes, vmem_budget):
    """Batch tile for the fused path: keep blocks near the 1-8 MiB sweet spot,
    keep >= 8 grid steps whenever B allows (>= 4 per TensorCore on v7x), and
    never let 5x the block exceed the VMEM budget."""
    tb_by_bytes = max(1, _TARGET_BLOCK_BYTES // per_batch_bytes)
    tb_by_vmem = max(1, vmem_budget // (5 * per_batch_bytes))
    tb_by_steps = max(1, B // 8)
    tb = int(max(1, min(B, tb_by_bytes, tb_by_vmem, tb_by_steps)))
    while B % tb:                       # make it a divisor of B
        tb -= 1
    return tb


def _pick_spatial_tile(S, C, itemsize):
    """Spatial tile (lane axis) for the two-pass path: ~2 MiB blocks, 128-aligned."""
    ts = max(128, ((_TARGET_BLOCK_BYTES // (C * itemsize)) // 128) * 128)
    if ts >= S:
        return S, 1                     # full spatial extent as a single block
    return ts, -(-S // ts)              # ragged tail handled by Pallas OOB masking


# --------------------------------------------------------------------------- #
# Wrapper
# --------------------------------------------------------------------------- #
def sca3d_pallas(x, w1, b1, w2, b2, w_spa, *, single_pass=None, spatial_tile=None):
    """x: (B, C, D, H, W).  Weights in PyTorch layout:
       w1 (Hid, C), b1 (Hid,), w2 (C, Hid), b2 (C,), w_spa (C,) (1x1x1 conv)."""
    B, C, D, H, W = x.shape
    S = D * H * W
    Hid = w1.shape[0]
    itemsize = x.dtype.itemsize
    per_batch = C * S * itemsize

    if single_pass is None:
        single_pass = per_batch <= _SINGLE_PASS_MAX_PER_BATCH

    # No host-side padding: the last dim stays the true S (free bitcast reshape).
    x_flat = x.reshape(B, C, S)

    f32 = jnp.float32
    w1 = w1.astype(f32)
    w2 = w2.astype(f32)
    b1_r = b1.astype(f32).reshape(1, Hid)          # lane-dense biases
    b2_r = b2.astype(f32).reshape(1, C)
    wspa_c = w_spa.astype(f32).reshape(C, 1)       # broadcast column per channel
    weights_bytes = 4 * (w1.size + w2.size + b1_r.size + b2_r.size + wspa_c.size)

    budget = _vmem_budget()

    if single_pass:
        TB = _pick_batch_tile(B, per_batch, budget)
        block_bytes = TB * per_batch
        cost = pl.CostEstimate(
            flops=7 * B * C * S,
            transcendentals=B * (S + C),
            bytes_accessed=2 * B * C * S * itemsize,
        )
        out = pl.pallas_call(
            functools.partial(_sca3d_fused_kernel, inv_s=1.0 / S),
            out_shape=jax.ShapeDtypeStruct((B, C, S), x.dtype),
            grid_spec=pltpu.PrefetchScalarGridSpec(
                num_scalar_prefetch=0,
                grid=(B // TB,),
                in_specs=[
                    pl.BlockSpec((TB, C, S), lambda b: (b, 0, 0)),   # x batch tile
                    pl.BlockSpec((Hid, C), lambda b: (0, 0)),        # W1
                    pl.BlockSpec((1, Hid), lambda b: (0, 0)),        # b1
                    pl.BlockSpec((C, Hid), lambda b: (0, 0)),        # W2
                    pl.BlockSpec((1, C), lambda b: (0, 0)),          # b2
                    pl.BlockSpec((C, 1), lambda b: (0, 0)),          # w_spa column
                ],
                out_specs=pl.BlockSpec((TB, C, S), lambda b: (b, 0, 0)),
            ),
            compiler_params=pltpu.CompilerParams(
                dimension_semantics=("parallel",),
                vmem_limit_bytes=_vmem_limit(block_bytes, weights_bytes),
            ),
            cost_estimate=cost,
        )(x_flat, w1, b1_r, w2, b2_r, wspa_c)
        return out.reshape(B, C, D, H, W)

    # ---- two-pass path (large volumes): pooling pass + streamed combine ---- #
    # Pass 1: global average pool + channel excitation.  (B, C) is tiny; one
    # plain XLA reduction over x is a single HBM read and needs no Pallas
    # plumbing (sanctioned by the perf review).
    pooled = jnp.mean(x_flat.astype(f32), axis=-1)             # (B, C)
    z1 = jnp.maximum(pooled @ w1.T + b1_r, 0.0)                # (B, Hid)
    chn_gate = jax.nn.sigmoid(z1 @ w2.T + b2_r)                # (B, C)
    chn_gate = chn_gate.reshape(B, C, 1)

    # Pass 2: stream x with a (batch, spatial-tile) grid; VMEM independent of S.
    if spatial_tile is None:
        TS, n_s = _pick_spatial_tile(S, C, itemsize)
    else:
        TS = min(int(spatial_tile), S)
        n_s = -(-S // TS)
    TB = 1                                   # spatial tiling already gives B*n_s steps
    block_bytes = TB * C * TS * itemsize
    cost = pl.CostEstimate(
        flops=6 * B * C * S,
        transcendentals=B * S,
        bytes_accessed=2 * B * C * S * itemsize,
    )
    out = pl.pallas_call(
        _sca3d_combine_kernel,
        out_shape=jax.ShapeDtypeStruct((B, C, S), x.dtype),
        grid_spec=pltpu.PrefetchScalarGridSpec(
            num_scalar_prefetch=0,
            grid=(B // TB, n_s),
            in_specs=[
                pl.BlockSpec((TB, C, TS), lambda b, s: (b, 0, s)),   # x tile
                pl.BlockSpec((TB, C, 1), lambda b, s: (b, 0, 0)),    # chn_gate
                pl.BlockSpec((C, 1), lambda b, s: (0, 0)),           # w_spa column
            ],
            out_specs=pl.BlockSpec((TB, C, TS), lambda b, s: (b, 0, s)),
        ),
        compiler_params=pltpu.CompilerParams(
            dimension_semantics=("parallel", "parallel"),
            vmem_limit_bytes=_vmem_limit(block_bytes, weights_bytes + B * C * 4),
        ),
        cost_estimate=cost,
    )(x_flat, chn_gate, wspa_c)
    return out.reshape(B, C, D, H, W)


# --------------------------------------------------------------------------- #
# Pure-JAX reference (matches the PyTorch forward)
# --------------------------------------------------------------------------- #
def sca3d_reference(x, w1, b1, w2, b2, w_spa):
    B, C = x.shape[:2]
    pooled = jnp.mean(x, axis=(2, 3, 4))                          # (B, C)
    z1 = jnp.maximum(pooled @ w1.T + b1, 0.0)                     # (B, Hid)
    chn = jax.nn.sigmoid(z1 @ w2.T + b2).reshape(B, C, 1, 1, 1)
    spa = jax.nn.sigmoid(jnp.einsum("bcdhw,c->bdhw", x, w_spa))[:, None]
    return x * spa + x + x * chn


if __name__ == "__main__":
    # SCA3D(channel=32, reduction=16)
    C, reduction = 32, 16
    Hid = C // reduction

    key = jax.random.PRNGKey(0)
    kx, k1, k2, k3, k4, k5, kx2 = jax.random.split(key, 7)

    w1 = jax.random.normal(k1, (Hid, C), dtype=jnp.float32) * 0.1   # Linear(C->Hid).weight
    b1 = jax.random.normal(k2, (Hid,), dtype=jnp.float32) * 0.1     # Linear(C->Hid).bias
    w2 = jax.random.normal(k3, (C, Hid), dtype=jnp.float32) * 0.1   # Linear(Hid->C).weight
    b2 = jax.random.normal(k4, (C,), dtype=jnp.float32) * 0.1       # Linear(Hid->C).bias
    w_spa = jax.random.normal(k5, (C,), dtype=jnp.float32) * 0.1    # Conv3d(C->1,1).weight

    x_aligned = jax.random.normal(kx, (2, C, 8, 8, 8), dtype=jnp.float32)   # S=512 (128-aligned)
    x_ragged = jax.random.normal(kx2, (2, C, 7, 7, 7), dtype=jnp.float32)   # S=343 (unaligned)

    cases = [
        ("fused/aligned", x_aligned, {}),
        ("2pass/aligned", x_aligned, {"single_pass": False, "spatial_tile": 128}),
        ("fused/ragged", x_ragged, {}),
        ("2pass/ragged", x_ragged, {"single_pass": False, "spatial_tile": 128}),
    ]
    for name, xin, kw in cases:
        out = jax.block_until_ready(sca3d_pallas(xin, w1, b1, w2, b2, w_spa, **kw))
        ref = sca3d_reference(xin, w1, b1, w2, b2, w_spa)
        assert out.shape == xin.shape, f"shape mismatch: {name}"
        assert jnp.allclose(out, ref, atol=1e-5, rtol=1e-5), f"mismatch vs reference: {name}"

    print("KERNEL_OK")
</pallas_src>

<mosaic_0001>
module attributes {stable_mosaic.version = 11 : i64} {
  func.func @_sca3d_fused_kernel(%arg0: i32, %arg1: memref<1x32x512xf32, #tpu.memory_space<vmem>>, %arg2: memref<2x32xf32, #tpu.memory_space<vmem>>, %arg3: memref<1x2xf32, #tpu.memory_space<vmem>>, %arg4: memref<32x2xf32, #tpu.memory_space<vmem>>, %arg5: memref<1x32xf32, #tpu.memory_space<vmem>>, %arg6: memref<32x1xf32, #tpu.memory_space<vmem>>, %arg7: memref<1x32x512xf32, #tpu.memory_space<vmem>>) attributes {dimension_semantics = [#tpu.dimension_semantics<parallel>], iteration_bounds = array<i64: 2>, scalar_prefetch = 0 : i64, scratch_operands = 0 : i64, tpu.core_type = #tpu.core_type<tc>, window_params = [{transform_indices = @transform_0, window_bounds = array<i64: 1, 32, 512>}, {pipeline_mode = #tpu.pipeline_mode<synchronous>, transform_indices = @transform_1, window_bounds = array<i64: 2, 32>}, {pipeline_mode = #tpu.pipeline_mode<synchronous>, transform_indices = @transform_2, window_bounds = array<i64: 1, 2>}, {pipeline_mode = #tpu.pipeline_mode<synchronous>, transform_indices = @transform_3, window_bounds = array<i64: 32, 2>}, {pipeline_mode = #tpu.pipeline_mode<synchronous>, transform_indices = @transform_4, window_bounds = array<i64: 1, 32>}, {pipeline_mode = #tpu.pipeline_mode<synchronous>, transform_indices = @transform_5, window_bounds = array<i64: 32, 1>}, {transform_indices = @transform_6, window_bounds = array<i64: 1, 32, 512>}]} {
    %c0 = arith.constant 0 : index
    %c0_0 = arith.constant 0 : index
    %c0_1 = arith.constant 0 : index
    %0 = vector.load %arg1[%c0, %c0_0, %c0_1] : memref<1x32x512xf32, #tpu.memory_space<vmem>>, vector<1x32x512xf32>
    %cst = arith.constant dense<0.000000e+00> : vector<1x32xf32>
    %1 = vector.multi_reduction <add>, %0, %cst [2] : vector<1x32x512xf32> to vector<1x32xf32>
    %cst_2 = arith.constant 0.001953125 : f32
    %2 = vector.broadcast %cst_2 : f32 to vector<1x32xf32>
    %3 = arith.mulf %1, %2 : vector<1x32xf32>
    %4 = vector.shape_cast %3 : vector<1x32xf32> to vector<1x1x32xf32>
    %c0_3 = arith.constant 0 : index
    %c0_4 = arith.constant 0 : index
    %5 = vector.load %arg2[%c0_3, %c0_4] : memref<2x32xf32, #tpu.memory_space<vmem>>, vector<2x32xf32>
    %6 = vector.shape_cast %5 : vector<2x32xf32> to vector<1x2x32xf32>
    %7 = vector.broadcast %4 : vector<1x1x32xf32> to vector<1x2x32xf32>
    %8 = arith.mulf %7, %6 : vector<1x2x32xf32>
    %cst_5 = arith.constant dense<0.000000e+00> : vector<1x2xf32>
    %9 = vector.multi_reduction <add>, %8, %cst_5 [2] : vector<1x2x32xf32> to vector<1x2xf32>
    %c0_6 = arith.constant 0 : index
    %c0_7 = arith.constant 0 : index
    %10 = vector.load %arg3[%c0_6, %c0_7] : memref<1x2xf32, #tpu.memory_space<vmem>>, vector<1x2xf32>
    %11 = arith.addf %9, %10 : vector<1x2xf32>
    %cst_8 = arith.constant 0.000000e+00 : f32
    %12 = vector.broadcast %cst_8 : f32 to vector<1x2xf32>
    %13 = arith.maximumf %11, %12 : vector<1x2xf32>
    %14 = vector.shape_cast %13 : vector<1x2xf32> to vector<1x1x2xf32>
    %c0_9 = arith.constant 0 : index
    %c0_10 = arith.constant 0 : index
    %15 = vector.load %arg4[%c0_9, %c0_10] : memref<32x2xf32, #tpu.memory_space<vmem>>, vector<32x2xf32>
    %16 = vector.shape_cast %15 : vector<32x2xf32> to vector<1x32x2xf32>
    %17 = vector.broadcast %14 : vector<1x1x2xf32> to vector<1x32x2xf32>
    %18 = arith.mulf %17, %16 : vector<1x32x2xf32>
    %cst_11 = arith.constant dense<0.000000e+00> : vector<1x32xf32>
    %19 = vector.multi_reduction <add>, %18, %cst_11 [2] : vector<1x32x2xf32> to vector<1x32xf32>
    %c0_12 = arith.constant 0 : index
    %c0_13 = arith.constant 0 : index
    %20 = vector.load %arg5[%c0_12, %c0_13] : memref<1x32xf32, #tpu.memory_space<vmem>>, vector<1x32xf32>
    %21 = arith.addf %19, %20 : vector<1x32xf32>
    %22 = arith.negf %21 : vector<1x32xf32>
    %23 = math.exp %22 : vector<1x32xf32>
    %cst_14 = arith.constant 1.000000e+00 : f32
    %24 = vector.broadcast %cst_14 : f32 to vector<1x32xf32>
    %25 = arith.addf %24, %23 : vector<1x32xf32>
    %26 = arith.divf %24, %25 : vector<1x32xf32>
    %27 = vector.shape_cast %26 : vector<1x32xf32> to vector<1x32x1xf32>
    %c0_15 = arith.constant 0 : index
    %c0_16 = arith.constant 0 : index
    %28 = vector.load %arg6[%c0_15, %c0_16] : memref<32x1xf32, #tpu.memory_space<vmem>>, vector<32x1xf32>
    %29 = vector.shape_cast %28 : vector<32x1xf32> to vector<1x32x1xf32>
    %30 = vector.broadcast %29 : vector<1x32x1xf32> to vector<1x32x512xf32>
    %31 = arith.mulf %0, %30 : vector<1x32x512xf32>
    %cst_17 = arith.constant dense<0.000000e+00> : vector<1x512xf32>
    %32 = vector.multi_reduction <add>, %31, %cst_17 [1] : vector<1x32x512xf32> to vector<1x512xf32>
    %33 = vector.shape_cast %32 : vector<1x512xf32> to vector<1x1x512xf32>
    %34 = arith.negf %33 : vector<1x1x512xf32>
    %35 = math.exp %34 : vector<1x1x512xf32>
    %cst_18 = arith.constant 1.000000e+00 : f32
    %36 = vector.broadcast %cst_18 : f32 to vector<1x1x512xf32>
    %37 = arith.addf %36, %35 : vector<1x1x512xf32>
    %38 = arith.divf %36, %37 : vector<1x1x512xf32>
    %cst_19 = arith.constant 1.000000e+00 : f32
    %39 = vector.broadcast %cst_19 : f32 to vector<1x1x512xf32>
    %40 = arith.addf %39, %38 : vector<1x1x512xf32>
    %41 = vector.broadcast %40 : vector<1x1x512xf32> to vector<1x32x512xf32>
    %42 = vector.broadcast %27 : vector<1x32x1xf32> to vector<1x32x512xf32>
    %43 = arith.addf %41, %42 : vector<1x32x512xf32>
    %44 = arith.mulf %0, %43 : vector<1x32x512xf32>
    %c0_20 = arith.constant 0 : index
    %c0_21 = arith.constant 0 : index
    %c0_22 = arith.constant 0 : index
    %45 = vector.load %arg7[%c0_20, %c0_21, %c0_22] : memref<1x32x512xf32, #tpu.memory_space<vmem>>, vector<1x32x512xf32>
    tpu.vector_store %arg7[%c0_20, %c0_21, %c0_22], %44 {strides = array<i32>} : memref<1x32x512xf32, #tpu.memory_space<vmem>>, vector<1x32x512xf32>,
    return
  }
  func.func @transform_0(%arg0: i32) -> (i32, i32, i32) {
    %c0_i32 = arith.constant 0 : i32
    %c0_i32_0 = arith.constant 0 : i32
    %c0_i32_1 = arith.constant 0 : i32
    return %arg0, %c0_i32, %c0_i32_0 : i32, i32, i32
  }
  func.func @transform_1(%arg0: i32) -> (i32, i32) {
    %c0_i32 = arith.constant 0 : i32
    %c0_i32_0 = arith.constant 0 : i32
    %c0_i32_1 = arith.constant 0 : i32
    return %c0_i32, %c0_i32_0 : i32, i32
  }
  func.func @transform_2(%arg0: i32) -> (i32, i32) {
    %c0_i32 = arith.constant 0 : i32
    %c0_i32_0 = arith.constant 0 : i32
    %c0_i32_1 = arith.constant 0 : i32
    return %c0_i32, %c0_i32_0 : i32, i32
  }
  func.func @transform_3(%arg0: i32) -> (i32, i32) {
    %c0_i32 = arith.constant 0 : i32
    %c0_i32_0 = arith.constant 0 : i32
    %c0_i32_1 = arith.constant 0 : i32
    return %c0_i32, %c0_i32_0 : i32, i32
  }
  func.func @transform_4(%arg0: i32) -> (i32, i32) {
    %c0_i32 = arith.constant 0 : i32
    %c0_i32_0 = arith.constant 0 : i32
    %c0_i32_1 = arith.constant 0 : i32
    return %c0_i32, %c0_i32_0 : i32, i32
  }
  func.func @transform_5(%arg0: i32) -> (i32, i32) {
    %c0_i32 = arith.constant 0 : i32
    %c0_i32_0 = arith.constant 0 : i32
    %c0_i32_1 = arith.constant 0 : i32
    return %c0_i32, %c0_i32_0 : i32, i32
  }
  func.func @transform_6(%arg0: i32) -> (i32, i32, i32) {
    %c0_i32 = arith.constant 0 : i32
    %c0_i32_0 = arith.constant 0 : i32
    %c0_i32_1 = arith.constant 0 : i32
    return %arg0, %c0_i32, %c0_i32_0 : i32, i32, i32
  }
}

</mosaic_0001>

<llo_original>
// kernel: tpu_custom_call.1
$region0: #{tpu_custom_call.1}
  #allocation0 [shape = 'u32[]', space=smem, size = 0x4, offset = 0x4, fixed_abs, tag = 'smem constant byte address 0x4 - core index']
  #allocation1 [shape = 'u32[144,128]{1,0:T(1,128)}', space=vmem, size = 0x12000, scoped, tag = 'internal scratch']
  %s0 = inlined_call_operand.hbm [shape: f32[2,32,512], index: 0, kind: input, shape index: {}]
  %s1 = inlined_call_operand.vmem [shape: f32[2,32], index: 1, kind: input, shape index: {}]
  %s2 = inlined_call_operand.vmem [shape: f32[1,2], index: 2, kind: input, shape index: {}]
  %s3 = inlined_call_operand.vmem [shape: f32[32,2], index: 3, kind: input, shape index: {}]
  %s4 = inlined_call_operand.vmem [shape: f32[1,32], index: 4, kind: input, shape index: {}]
  %s5 = inlined_call_operand.vmem [shape: f32[32,1], index: 5, kind: input, shape index: {}]
  %s6 = inlined_call_operand.hbm [shape: f32[2,32,512], index: 6, kind: output, shape index: {}]
  %s7 = sld [smem:[#allocation0]]
  $region61: #{tpu_custom_call.1} parent=0
    _
  %s9 = ssub.s32 1, %s7
  %s10 = scalar_select 0, %s9, %s7
  $region1: #{tpu_custom_call.1} parent=0
    #allocation2 [shape = 'u8[131072]{0}', space=vmem, size = 0x20000, scoped, tag = 'input window, operand 0']
    #allocation3 [shape = 's32[2]{0}', space=sflag, size = 0x8, scoped, tag = 'scoped memory for tpu_custom_call.1']
    #allocation4 [shape = 's32[2]{0}', space=sflag, size = 0x8, scoped, tag = 'scoped memory for tpu_custom_call.1']
    #allocation5 [shape = 'u8[131072]{0}', space=vmem, size = 0x20000, scoped, tag = 'output window, operand 0']
    %11 = vsyncpa [#allocation3], 0
    %s12 = scalar_lea.sflag [#allocation3], 1
    %13 = vsyncpa %s12, 0
    %14 = vsyncpa [#allocation4], 0
    %s15 = scalar_lea.sflag [#allocation4], 1
    %16 = vsyncpa %s15, 0
    loop: start=0, step=1, limit=4
    $region2: #{tpu_custom_call.1} parent=1 // loop_pre_header
      _
    $region3: #{tpu_custom_call.1} parent=1 // loop_header
      %s18 = sphi 0, %s22
      %p19 = scmp.ge.s32.totalorder %s18, 4
      %s28 = sphi 0, %s30
      %s31 = sphi 0, %s28
      %s32 = sphi 0, %s31
      %s48 = sphi 0, %s32
      %s52 = sphi 0, %s52
      %s54 = sphi 0, %s52
      %s55 = sphi 0, %s54
      %s69 = sphi 0, %s55
      %s73 = sphi 0, %s73
      %s75 = sphi 0, %s73
      %s76 = sphi 0, %s75
      %s90 = sphi 0, %s76
      %s94 = sphi 0, %s94
      %s96 = sphi 0, %s94
      %s97 = sphi 0, %s96
      %s111 = sphi 0, %s97
      %s115 = sphi 0, %s115
      %s117 = sphi 0, %s115
      %s118 = sphi 0, %s117
      %s132 = sphi 0, %s118
      %s136 = sphi 0, %s136
      %s138 = sphi 0, %s136
      %s139 = sphi 0, %s138
      %s153 = sphi 0, %s139
      %s159 = sphi 0, %s161
      %s162 = sphi 0, %s159
      %s163 = sphi 0, %s162
      %s179 = sphi 0, %s163
    $region4: #{tpu_custom_call.1} parent=1 // loop_header_branch
      %21 = sbr.rel (%p19) target = $region8
    $region5: #{tpu_custom_call.1} parent=1 // loop_body
      %s23 = ssub.s32 %s18, 1
      %s24 = ssub.s32 %s18, 2
      %s25 = sadd.s32 %s18, 1
      %s26 = ssub.s32 %s18, %s25
      %p27 = scmp.eq.s32.totalorder %s26, 0
      %s29 = sadd.s32 %s28, 1
      %s30 = scalar_select %p27, %s28, %s29
      %p33 = pneg %p27
      %p34 = scmp.eq.s32.totalorder %s18, 1
      %p35 = por %p33, %p34
      %p36 = scmp.ne.s32.totalorder %s28, %s31
      %p37 = scmp.eq.s32.totalorder %s18, 0
      %p38 = por %p36, %p37
      %p39 = scmp.ne.s32.totalorder %s28, %s31
      %p40 = scmp.eq.s32.totalorder %s23, 1
      %p41 = por %p39, %p40
      %p42 = scmp.ne.s32.totalorder %s31, %s32
      %p43 = scmp.eq.s32.totalorder %s23, 0
      %p44 = por %p42, %p43
      %p45 = scmp.ne.s32.totalorder %s31, %s32
      %p46 = scmp.eq.s32.totalorder %s24, 1
      %p47 = por %p45, %p46
      %p49 = scmp.ne.s32.totalorder %s32, %s48
      %p50 = scmp.eq.s32.totalorder %s24, 0
      %p51 = por %p49, %p50
      %s53 = sadd.s32 %s52, 1
      %p56 = scmp.eq.s32.totalorder %s18, 1
      %p57 = scmp.ne.s32.totalorder %s52, %s54
      %p58 = scmp.eq.s32.totalorder %s18, 0
      %p59 = por %p57, %p58
      %p60 = scmp.ne.s32.totalorder %s52, %s54
      %p61 = scmp.eq.s32.totalorder %s23, 1
      %p62 = por %p60, %p61
      %p63 = scmp.ne.s32.totalorder %s54, %s55
      %p64 = scmp.eq.s32.totalorder %s23, 0
      %p65 = por %p63, %p64
      %p66 = scmp.ne.s32.totalorder %s54, %s55
      %p67 = scmp.eq.s32.totalorder %s24, 1
      %p68 = por %p66, %p67
      %p70 = scmp.ne.s32.totalorder %s55, %s69
      %p71 = scmp.eq.s32.totalorder %s24, 0
      %p72 = por %p70, %p71
      %s74 = sadd.s32 %s73, 1
      %p77 = scmp.eq.s32.totalorder %s18, 1
      %p78 = scmp.ne.s32.totalorder %s73, %s75
      %p79 = scmp.eq.s32.totalorder %s18, 0
      %p80 = por %p78, %p79
      %p81 = scmp.ne.s32.totalorder %s73, %s75
      %p82 = scmp.eq.s32.totalorder %s23, 1
      %p83 = por %p81, %p82
      %p84 = scmp.ne.s32.totalorder %s75, %s76
      %p85 = scmp.eq.s32.totalorder %s23, 0
      %p86 = por %p84, %p85
      %p87 = scmp.ne.s32.totalorder %s75, %s76
      %p88 = scmp.eq.s32.totalorder %s24, 1
      %p89 = por %p87, %p88
      %p91 = scmp.ne.s32.totalorder %s76, %s90
      %p92 = scmp.eq.s32.totalorder %s24, 0
      %p93 = por %p91, %p92
      %s95 = sadd.s32 %s94, 1
      %p98 = scmp.eq.s32.totalorder %s18, 1
      %p99 = scmp.ne.s32.totalorder %s94, %s96
      %p100 = scmp.eq.s32.totalorder %s18, 0
      %p101 = por %p99, %p100
      %p102 = scmp.ne.s32.totalorder %s94, %s96
      %p103 = scmp.eq.s32.totalorder %s23, 1
      %p104 = por %p102, %p103
      %p105 = scmp.ne.s32.totalorder %s96, %s97
      %p106 = scmp.eq.s32.totalorder %s23, 0
      %p107 = por %p105, %p106
      %p108 = scmp.ne.s32.totalorder %s96, %s97
      %p109 = scmp.eq.s32.totalorder %s24, 1
      %p110 = por %p108, %p109
      %p112 = scmp.ne.s32.totalorder %s97, %s111
      %p113 = scmp.eq.s32.totalorder %s24, 0
      %p114 = por %p112, %p113
      %s116 = sadd.s32 %s115, 1
      %p119 = scmp.eq.s32.totalorder %s18, 1
      %p120 = scmp.ne.s32.totalorder %s115, %s117
      %p121 = scmp.eq.s32.totalorder %s18, 0
      %p122 = por %p120, %p121
      %p123 = scmp.ne.s32.totalorder %s115, %s117
      %p124 = scmp.eq.s32.totalorder %s23, 1
      %p125 = por %p123, %p124
      %p126 = scmp.ne.s32.totalorder %s117, %s118
      %p127 = scmp.eq.s32.totalorder %s23, 0
      %p128 = por %p126, %p127
      %p129 = scmp.ne.s32.totalorder %s117, %s118
      %p130 = scmp.eq.s32.totalorder %s24, 1
      %p131 = por %p129, %p130
      %p133 = scmp.ne.s32.totalorder %s118, %s132
      %p134 = scmp.eq.s32.totalorder %s24, 0
      %p135 = por %p133, %p134
      %s137 = sadd.s32 %s136, 1
      %p140 = scmp.eq.s32.totalorder %s18, 1
      %p141 = scmp.ne.s32.totalorder %s136, %s138
      %p142 = scmp.eq.s32.totalorder %s18, 0
      %p143 = por %p141, %p142
      %p144 = scmp.ne.s32.totalorder %s136, %s138
      %p145 = scmp.eq.s32.totalorder %s23, 1
      %p146 = por %p144, %p145
      %p147 = scmp.ne.s32.totalorder %s138, %s139
      %p148 = scmp.eq.s32.totalorder %s23, 0
      %p149 = por %p147, %p148
      %p150 = scmp.ne.s32.totalorder %s138, %s139
      %p151 = scmp.eq.s32.totalorder %s24, 1
      %p152 = por %p150, %p151
      %p154 = scmp.ne.s32.totalorder %s139, %s153
      %p155 = scmp.eq.s32.totalorder %s24, 0
      %p156 = por %p154, %p155
      %s157 = ssub.s32 %s18, %s25
      %p158 = scmp.eq.s32.totalorder %s157, 0
      %s160 = sadd.s32 %s159, 1
      %s161 = scalar_select %p158, %s159, %s160
      %p164 = pneg %p158
      %p165 = scmp.eq.s32.totalorder %s18, 1
      %p166 = por %p164, %p165
      %p167 = scmp.ne.s32.totalorder %s159, %s162
      %p168 = scmp.eq.s32.totalorder %s18, 0
      %p169 = por %p167, %p168
      %p170 = scmp.ne.s32.totalorder %s159, %s162
      %p171 = scmp.eq.s32.totalorder %s23, 1
      %p172 = por %p170, %p171
      %p173 = scmp.ne.s32.totalorder %s162, %s163
      %p174 = scmp.eq.s32.totalorder %s23, 0
      %p175 = por %p173, %p174
      %p176 = scmp.ne.s32.totalorder %s162, %s163
      %p177 = scmp.eq.s32.totalorder %s24, 1
      %p178 = por %p176, %p177
      %p180 = scmp.ne.s32.totalorder %s163, %s179
      %p181 = scmp.eq.s32.totalorder %s24, 0
      %p182 = por %p180, %p181
      %p183 = scmp.le.s32.totalorder 1, %s18
      %p184 = scmp.lt.s32.totalorder %s18, 3
      %p185 = pnand %p183, %p184
      %p186 = pneg %p185
      // Predicated region
      $region9: #{tpu_custom_call.1} parent=5 // pred_check
        _
      $region10: #{tpu_custom_call.1} parent=5 // pred_check_branch
        %188 = sbr.rel (%p185) target = $region12
      $region11: #{tpu_custom_call.1} parent=5 // pred_region
        %s189 = ssub.s32 %s18, 1
        // Predicated region
        $region13: #{tpu_custom_call.1} parent=11 // pred_check
          %p190 = pneg %p65
        $region14: #{tpu_custom_call.1} parent=11 // pred_check_branch
          %192 = sbr.rel (%p190) target = $region16
        $region15: #{tpu_custom_call.1} parent=11 // pred_region
          _
        $region16: #{tpu_custom_call.1} parent=11 // pred_fallthru
          _
        // Predicated region
        $region17: #{tpu_custom_call.1} parent=11 // pred_check
          %p193 = pneg %p86
        $region18: #{tpu_custom_call.1} parent=11 // pred_check_branch
          %195 = sbr.rel (%p193) target = $region20
        $region19: #{tpu_custom_call.1} parent=11 // pred_region
          _
        $region20: #{tpu_custom_call.1} parent=11 // pred_fallthru
          _
        // Predicated region
        $region21: #{tpu_custom_call.1} parent=11 // pred_check
          %p196 = pneg %p107
        $region22: #{tpu_custom_call.1} parent=11 // pred_check_branch
          %198 = sbr.rel (%p196) target = $region24
        $region23: #{tpu_custom_call.1} parent=11 // pred_region
          _
        $region24: #{tpu_custom_call.1} parent=11 // pred_fallthru
          _
        // Predicated region
        $region25: #{tpu_custom_call.1} parent=11 // pred_check
          %p199 = pneg %p128
        $region26: #{tpu_custom_call.1} parent=11 // pred_check_branch
          %201 = sbr.rel (%p199) target = $region28
        $region27: #{tpu_custom_call.1} parent=11 // pred_region
          _
        $region28: #{tpu_custom_call.1} parent=11 // pred_fallthru
          _
        // Predicated region
        $region29: #{tpu_custom_call.1} parent=11 // pred_check
          %p202 = pneg %p149
        $region30: #{tpu_custom_call.1} parent=11 // pred_check_branch
          %204 = sbr.rel (%p202) target = $region32
        $region31: #{tpu_custom_call.1} parent=11 // pred_region
          _
        $region32: #{tpu_custom_call.1} parent=11 // pred_fallthru
          _
      $region12: #{tpu_custom_call.1} parent=5 // pred_fallthru
        _
      %p205 = scmp.lt.s32.totalorder %s18, 2
      // Predicated region
      $region33: #{tpu_custom_call.1} parent=5 // pred_check
        %p206 = pneg %p205
      $region34: #{tpu_custom_call.1} parent=5 // pred_check_branch
        %208 = sbr.rel (%p206) target = $region36
      $region35: #{tpu_custom_call.1} parent=5 // pred_region
        // Predicated region
        $region37: #{tpu_custom_call.1} parent=35 // pred_check
          %p209 = pneg %p38
        $region38: #{tpu_custom_call.1} parent=35 // pred_check_branch
          %211 = sbr.rel (%p209) target = $region40
        $region39: #{tpu_custom_call.1} parent=35 // pred_region
          %s212 = sand.u32 %s28, 1
          %s213 = scalar_lea.sflag [#allocation3], %s212
          %s214 = sand.u32 %s28, 1
          %s215 = smul.addr %s214, 128
          %s216 = scalar_lea.vmem [#allocation2], %s215
          %s218 = ssub.s32 2048, 2048
          %219 = vsyncadd %s213, %s218
          %s220 = smul.addr %s18, 16
          %s221 = smul.addr %s220, 128
          %s222 = scalar_lea.hbm %s0, %s221
          %s223 = sshll.u32 %s216, 4
          %s224 = int_to_ptr.vmem [resolvable:$true] %s223
          %229 = dma.hbm_to_vmem [thread:$0]  %s222, 2048, %s224, %s213, 512, 512, 32
        $region40: #{tpu_custom_call.1} parent=35 // pred_fallthru
          _
      $region36: #{tpu_custom_call.1} parent=5 // pred_fallthru
        _
      %p230 = scmp.le.s32.totalorder 1, %s18
      %p231 = scmp.lt.s32.totalorder %s18, 3
      %p232 = pnand %p230, %p231
      %p233 = pneg %p232
      // Predicated region
      $region41: #{tpu_custom_call.1} parent=5 // pred_check
        _
      $region42: #{tpu_custom_call.1} parent=5 // pred_check_branch
        %235 = sbr.rel (%p232) target = $region44
      $region43: #{tpu_custom_call.1} parent=5 // pred_region
        %s236 = ssub.s32 %s18, 1
        %s237 = sand.u32 %s31, 1
        %s238 = scalar_lea.sflag [#allocation3], %s237
        %s239 = sand.u32 %s31, 1
        %s240 = smul.addr %s239, 128
        %s241 = scalar_lea.vmem [#allocation2], %s240
        // Predicated region
        $region45: #{tpu_custom_call.1} parent=43 // pred_check
          %p242 = pneg %p44
        $region46: #{tpu_custom_call.1} parent=43 // pred_check_branch
          %244 = sbr.rel (%p242) target = $region48
        $region47: #{tpu_custom_call.1} parent=43 // pred_region
          %245 = dma.done %s238, 2048
        $region48: #{tpu_custom_call.1} parent=43 // pred_fallthru
          _
        %s246 = sand.u32 %s31, 1
        %s247 = scalar_lea.sflag [#allocation3], %s246
        %s248 = sand.u32 %s31, 1
        %s249 = smul.addr %s248, 128
        %s250 = scalar_lea.vmem [#allocation2], %s249
        %p251 = pneg %p44
        %p252 = pneg %p41
        %p253 = pneg %p65
        %p254 = pneg %p62
        %p255 = pneg %p86
        %p256 = pneg %p83
        %p257 = pneg %p107
        %p258 = pneg %p104
        %p259 = pneg %p128
        %p260 = pneg %p125
        %p261 = pneg %p149
        %p262 = pneg %p146
        %p263 = pneg %p175
        %p264 = pneg %p172
        %s265 = sand.u32 %s162, 1
        %s266 = scalar_lea.sflag [#allocation4], %s265
        %s267 = sand.u32 %s162, 1
        %s268 = smul.addr %s267, 128
        %s269 = scalar_lea.vmem [#allocation5], %s268
        %v270 = vld [vmem:[%s241] sm:$0xff]
        %v271 = vld [vmem:[%s241 + $0x8] sm:$0xff]
        %v272 = vld [vmem:[%s241 + $0x10] sm:$0xff]
        %v273 = vld [vmem:[%s241 + $0x18] sm:$0xff]
        %v274 = vld [vmem:[%s241 + $0x20] sm:$0xff]
        %v275 = vld [vmem:[%s241 + $0x28] sm:$0xff]
        %v276 = vld [vmem:[%s241 + $0x30] sm:$0xff]
        %v277 = vld [vmem:[%s241 + $0x38] sm:$0xff]
        %v278 = vld [vmem:[%s241 + $0x40] sm:$0xff]
        %v279 = vld [vmem:[%s241 + $0x48] sm:$0xff]
        %v280 = vld [vmem:[%s241 + $0x50] sm:$0xff]
        %v281 = vld [vmem:[%s241 + $0x58] sm:$0xff]
        %v282 = vld [vmem:[%s241 + $0x60] sm:$0xff]
        %v283 = vld [vmem:[%s241 + $0x68] sm:$0xff]
        %v284 = vld [vmem:[%s241 + $0x70] sm:$0xff]
        %v285 = vld [vmem:[%s241 + $0x78] sm:$0xff]
        %v286 = vadd.f32 %v270, %v271
        %v287 = vadd.f32 %v286, %v272
        %v288 = vadd.f32 %v287, %v273
        %289 = vadd.xlane.f32.xlu0 %v288
        %v290 = vpop.xlane.xlu0 %289
        %v291 = vadd.f32 %v274, %v275
        %v292 = vadd.f32 %v291, %v276
        %v293 = vadd.f32 %v292, %v277
        %294 = vadd.xlane.f32.xlu0 %v293
        %v295 = vpop.xlane.xlu0 %294
        %v296 = vadd.f32 %v278, %v279
        %v297 = vadd.f32 %v296, %v280
        %v298 = vadd.f32 %v297, %v281
        %299 = vadd.xlane.f32.xlu0 %v298
        %v300 = vpop.xlane.xlu0 %299
        %v301 = vadd.f32 %v282, %v283
        %v302 = vadd.f32 %v301, %v284
        %v303 = vadd.f32 %v302, %v285
        %304 = vadd.xlane.f32.xlu0 %v303
        %v305 = vpop.xlane.xlu0 %304
        %v306 = vmul.f32 %v290, 0.001953125
        %v307 = vmul.f32 %v295, 0.001953125
        %v308 = vmul.f32 %v300, 0.001953125
        %v309 = vmul.f32 %v305, 0.001953125
        %v310 = vld [vmem:[%s1] sm:$0x3]
        %v312 = vlaneseq
        %v313 = vshrl.u32 %v312, 7
        %v314 = vsub.s32 0, %v313
        %v315 = vrot.slane %v310, %v314
        %317 = vbcast.lane.b32.xlu0 %v315, 256
        %v318 = vpop.permute.xlu0 %317
        %s320 = sor.u32 256, 8
        %321 = vbcast.lane.b32.xlu0 %v315, %s320
        %v322 = vpop.permute.xlu0 %321
        %s324 = sor.u32 256, 16
        %325 = vbcast.lane.b32.xlu0 %v315, %s324
        %v326 = vpop.permute.xlu0 %325
        %s328 = sor.u32 256, 24
        %329 = vbcast.lane.b32.xlu0 %v315, %s328
        %v330 = vpop.permute.xlu0 %329
        %v331 = vlaneseq
        %v332 = vshrl.u32 %v331, 7
        %v333 = vsub.s32 1, %v332
        %v334 = vrot.slane %v310, %v333
        %336 = vbcast.lane.b32.xlu0 %v334, 256
        %v337 = vpop.permute.xlu0 %336
        %s339 = sor.u32 256, 8
        %340 = vbcast.lane.b32.xlu0 %v334, %s339
        %v341 = vpop.permute.xlu0 %340
        %s343 = sor.u32 256, 16
        %344 = vbcast.lane.b32.xlu0 %v334, %s343
        %v345 = vpop.permute.xlu0 %344
        %s347 = sor.u32 256, 24
        %348 = vbcast.lane.b32.xlu0 %v334, %s347
        %v349 = vpop.permute.xlu0 %348
        %v358 = vmul.f32 %v306, %v318
        %v359 = vmul.f32 %v307, %v322
        %v360 = vmul.f32 %v308, %v326
        %v361 = vmul.f32 %v309, %v330
        %v362 = vmul.f32 %v306, %v337
        %v363 = vmul.f32 %v307, %v341
        %v364 = vmul.f32 %v308, %v345
        %v365 = vmul.f32 %v309, %v349
        %374 = vset.pattern.permute.xlu0 0
        %375 = vperm.xlu0 %374, %v358
        %v376 = vpop.permute.xlu0 %375
        %377 = vset.pattern.permute.xlu0 0
        %378 = vperm.xlu0 %377, %v359
        %v379 = vpop.permute.xlu0 %378
        %380 = vset.pattern.permute.xlu0 0
        %381 = vperm.xlu0 %380, %v360
        %v382 = vpop.permute.xlu0 %381
        %383 = vset.pattern.permute.xlu0 0
        %384 = vperm.xlu0 %383, %v361
        %v385 = vpop.permute.xlu0 %384
        %386 = vset.pattern.permute.xlu0 0
        %387 = vperm.xlu0 %386, %v362
        %v388 = vpop.permute.xlu0 %387
        %389 = vset.pattern.permute.xlu0 0
        %390 = vperm.xlu0 %389, %v363
        %v391 = vpop.permute.xlu0 %390
        %392 = vset.pattern.permute.xlu0 0
        %393 = vperm.xlu0 %392, %v364
        %v394 = vpop.permute.xlu0 %393
        %395 = vset.pattern.permute.xlu0 0
        %396 = vperm.xlu0 %395, %v365
        %v397 = vpop.permute.xlu0 %396
        %v398 = vlaneseq
        %v399 = vand.u32 %v398, 127
        %v400 = vlaneseq
        %v401 = vshrl.u32 %v400, 7
        %v402 = vsub.s32 %v399, %v401
        %v403 = vrot.slane %v376, %v402
        %v404 = vadd.s32 %v399, 4294967288
        %v405 = vlaneseq
        %v406 = vshrl.u32 %v405, 7
        %v407 = vsub.s32 %v404, %v406
        %v408 = vrot.slane %v379, %v407
        %vm409 = vcmask 130112
        %v410 = vsel %vm409, %v408, %v403
        %v411 = vadd.s32 %v399, 4294967280
        %v412 = vlaneseq
        %v413 = vshrl.u32 %v412, 7
        %v414 = vsub.s32 %v411, %v413
        %v415 = vrot.slane %v382, %v414
        %vm416 = vcmask 195712
        %v417 = vsel %vm416, %v415, %v410
        %v418 = vadd.s32 %v399, 4294967272
        %v419 = vlaneseq
        %v420 = vshrl.u32 %v419, 7
        %v421 = vsub.s32 %v418, %v420
        %v422 = vrot.slane %v385, %v421
        %vm423 = vcmask 261312
        %v424 = vsel %vm423, %v422, %v417
        %v425 = vlaneseq
        %v426 = vshrl.u32 %v425, 7
        %v427 = vsub.s32 %v399, %v426
        %v428 = vrot.slane %v388, %v427
        %v429 = vlaneseq
        %v430 = vshrl.u32 %v429, 7
        %v431 = vsub.s32 %v404, %v430
        %v432 = vrot.slane %v391, %v431
        %v433 = vsel %vm409, %v432, %v428
        %v434 = vlaneseq
        %v435 = vshrl.u32 %v434, 7
        %v436 = vsub.s32 %v411, %v435
        %v437 = vrot.slane %v394, %v436
        %v438 = vsel %vm416, %v437, %v433
        %v439 = vlaneseq
        %v440 = vshrl.u32 %v439, 7
        %v441 = vsub.s32 %v418, %v440
        %v442 = vrot.slane %v397, %v441
        %v443 = vsel %vm423, %v442, %v438
        %vm444 = vcmask 1041409
        %v445 = vsel %vm444, %v443, %v424
        %vm447 = vcmask 254976
        %v448 = vsel %vm447, %v445, 0.0
        %449 = vadd.xlane.f32.xlu0 %v448
        %v450 = vpop.xlane.xlu0 %449
        %v451 = vld [vmem:[%s2] sm:$0x1]
        %v453 = vlaneseq
        %v454 = vshrl.u32 %v453, 7
        %v455 = vsub.s32 0, %v454
        %v456 = vrot.slane %v451, %v455
        %458 = vbcast.lane.b32.xlu0 %v456, 256
        %v459 = vpop.permute.xlu0 %458
        %v461 = vadd.f32 %v450, %v459
        %v462 = vmax.f32 %v461, 0.0
        %v463 = vld [vmem:[%s3] sm:$0xff]
        %v464 = vld [vmem:[%s3 + $0x8] sm:$0xff]
        %v465 = vld [vmem:[%s3 + $0x10] sm:$0xff]
        %v466 = vld [vmem:[%s3 + $0x18] sm:$0xff]
        %v471 = vlaneseq
        %v472 = vshrl.u32 %v471, 7
        %v473 = vsub.s32 0, %v472
        %v474 = vrot.slane %v463, %v473
        %476 = vbcast.lane.b32.xlu0 %v474, 256
        %v477 = vpop.permute.xlu0 %476
        %v478 = vlaneseq
        %v479 = vshrl.u32 %v478, 7
        %v480 = vsub.s32 1, %v479
        %v481 = vrot.slane %v463, %v480
        %483 = vbcast.lane.b32.xlu0 %v481, 256
        %v484 = vpop.permute.xlu0 %483
        %v485 = vlaneseq
        %v486 = vshrl.u32 %v485, 7
        %v487 = vsub.s32 2, %v486
        %v488 = vrot.slane %v463, %v487
        %490 = vbcast.lane.b32.xlu0 %v488, 256
        %v491 = vpop.permute.xlu0 %490
        %v492 = vlaneseq
        %v493 = vshrl.u32 %v492, 7
        %v494 = vsub.s32 3, %v493
        %v495 = vrot.slane %v463, %v494
        %497 = vbcast.lane.b32.xlu0 %v495, 256
        %v498 = vpop.permute.xlu0 %497
        %v499 = vlaneseq
        %v500 = vshrl.u32 %v499, 7
        %v501 = vsub.s32 4, %v500
        %v502 = vrot.slane %v463, %v501
        %504 = vbcast.lane.b32.xlu0 %v502, 256
        %v505 = vpop.permute.xlu0 %504
        %v506 = vlaneseq
        %v507 = vshrl.u32 %v506, 7
        %v508 = vsub.s32 5, %v507
        %v509 = vrot.slane %v463, %v508
        %511 = vbcast.lane.b32.xlu0 %v509, 256
        %v512 = vpop.permute.xlu0 %511
        %v513 = vlaneseq
        %v514 = vshrl.u32 %v513, 7
        %v515 = vsub.s32 6, %v514
        %v516 = vrot.slane %v463, %v515
        %518 = vbcast.lane.b32.xlu0 %v516, 256
        %v519 = vpop.permute.xlu0 %518
        %v520 = vlaneseq
        %v521 = vshrl.u32 %v520, 7
        %v522 = vsub.s32 7, %v521
        %v523 = vrot.slane %v463, %v522
        %525 = vbcast.lane.b32.xlu0 %v523, 256
        %v526 = vpop.permute.xlu0 %525
        %v527 = vlaneseq
        %v528 = vshrl.u32 %v527, 7
        %v529 = vsub.s32 0, %v528
        %v530 = vrot.slane %v464, %v529
        %532 = vbcast.lane.b32.xlu0 %v530, 256
        %v533 = vpop.permute.xlu0 %532
        %v534 = vlaneseq
        %v535 = vshrl.u32 %v534, 7
        %v536 = vsub.s32 1, %v535
        %v537 = vrot.slane %v464, %v536
        %539 = vbcast.lane.b32.xlu0 %v537, 256
        %v540 = vpop.permute.xlu0 %539
        %v541 = vlaneseq
        %v542 = vshrl.u32 %v541, 7
        %v543 = vsub.s32 2, %v542
        %v544 = vrot.slane %v464, %v543
        %546 = vbcast.lane.b32.xlu0 %v544, 256
        %v547 = vpop.permute.xlu0 %546
        %v548 = vlaneseq
        %v549 = vshrl.u32 %v548, 7
        %v550 = vsub.s32 3, %v549
        %v551 = vrot.slane %v464, %v550
        %553 = vbcast.lane.b32.xlu0 %v551, 256
        %v554 = vpop.permute.xlu0 %553
        %v555 = vlaneseq
        %v556 = vshrl.u32 %v555, 7
        %v557 = vsub.s32 4, %v556
        %v558 = vrot.slane %v464, %v557
        %560 = vbcast.lane.b32.xlu0 %v558, 256
        %v561 = vpop.permute.xlu0 %560
        %v562 = vlaneseq
        %v563 = vshrl.u32 %v562, 7
        %v564 = vsub.s32 5, %v563
        %v565 = vrot.slane %v464, %v564
        %567 = vbcast.lane.b32.xlu0 %v565, 256
        %v568 = vpop.permute.xlu0 %567
        %v569 = vlaneseq
        %v570 = vshrl.u32 %v569, 7
        %v571 = vsub.s32 6, %v570
        %v572 = vrot.slane %v464, %v571
        %574 = vbcast.lane.b32.xlu0 %v572, 256
        %v575 = vpop.permute.xlu0 %574
        %v576 = vlaneseq
        %v577 = vshrl.u32 %v576, 7
        %v578 = vsub.s32 7, %v577
        %v579 = vrot.slane %v464, %v578
        %581 = vbcast.lane.b32.xlu0 %v579, 256
        %v582 = vpop.permute.xlu0 %581
        %v583 = vlaneseq
        %v584 = vshrl.u32 %v583, 7
        %v585 = vsub.s32 0, %v584
        %v586 = vrot.slane %v465, %v585
        %588 = vbcast.lane.b32.xlu0 %v586, 256
        %v589 = vpop.permute.xlu0 %588
        %v590 = vlaneseq
        %v591 = vshrl.u32 %v590, 7
        %v592 = vsub.s32 1, %v591
        %v593 = vrot.slane %v465, %v592
        %595 = vbcast.lane.b32.xlu0 %v593, 256
        %v596 = vpop.permute.xlu0 %595
        %v597 = vlaneseq
        %v598 = vshrl.u32 %v597, 7
        %v599 = vsub.s32 2, %v598
        %v600 = vrot.slane %v465, %v599
        %602 = vbcast.lane.b32.xlu0 %v600, 256
        %v603 = vpop.permute.xlu0 %602
        %v604 = vlaneseq
        %v605 = vshrl.u32 %v604, 7
        %v606 = vsub.s32 3, %v605
        %v607 = vrot.slane %v465, %v606
        %609 = vbcast.lane.b32.xlu0 %v607, 256
        %v610 = vpop.permute.xlu0 %609
        %v611 = vlaneseq
        %v612 = vshrl.u32 %v611, 7
        %v613 = vsub.s32 4, %v612
        %v614 = vrot.slane %v465, %v613
        %616 = vbcast.lane.b32.xlu0 %v614, 256
        %v617 = vpop.permute.xlu0 %616
        %v618 = vlaneseq
        %v619 = vshrl.u32 %v618, 7
        %v620 = vsub.s32 5, %v619
        %v621 = vrot.slane %v465, %v620
        %623 = vbcast.lane.b32.xlu0 %v621, 256
        %v624 = vpop.permute.xlu0 %623
        %v625 = vlaneseq
        %v626 = vshrl.u32 %v625, 7
        %v627 = vsub.s32 6, %v626
        %v628 = vrot.slane %v465, %v627
        %630 = vbcast.lane.b32.xlu0 %v628, 256
        %v631 = vpop.permute.xlu0 %630
        %v632 = vlaneseq
        %v633 = vshrl.u32 %v632, 7
        %v634 = vsub.s32 7, %v633
        %v635 = vrot.slane %v465, %v634
        %637 = vbcast.lane.b32.xlu0 %v635, 256
        %v638 = vpop.permute.xlu0 %637
        %v639 = vlaneseq
        %v640 = vshrl.u32 %v639, 7
        %v641 = vsub.s32 0, %v640
        %v642 = vrot.slane %v466, %v641
        %644 = vbcast.lane.b32.xlu0 %v642, 256
        %v645 = vpop.permute.xlu0 %644
        %v646 = vlaneseq
        %v647 = vshrl.u32 %v646, 7
        %v648 = vsub.s32 1, %v647
        %v649 = vrot.slane %v466, %v648
        %651 = vbcast.lane.b32.xlu0 %v649, 256
        %v652 = vpop.permute.xlu0 %651
        %v653 = vlaneseq
        %v654 = vshrl.u32 %v653, 7
        %v655 = vsub.s32 2, %v654
        %v656 = vrot.slane %v466, %v655
        %658 = vbcast.lane.b32.xlu0 %v656, 256
        %v659 = vpop.permute.xlu0 %658
        %v660 = vlaneseq
        %v661 = vshrl.u32 %v660, 7
        %v662 = vsub.s32 3, %v661
        %v663 = vrot.slane %v466, %v662
        %665 = vbcast.lane.b32.xlu0 %v663, 256
        %v666 = vpop.permute.xlu0 %665
        %v667 = vlaneseq
        %v668 = vshrl.u32 %v667, 7
        %v669 = vsub.s32 4, %v668
        %v670 = vrot.slane %v466, %v669
        %672 = vbcast.lane.b32.xlu0 %v670, 256
        %v673 = vpop.permute.xlu0 %672
        %v674 = vlaneseq
        %v675 = vshrl.u32 %v674, 7
        %v676 = vsub.s32 5, %v675
        %v677 = vrot.slane %v466, %v676
        %679 = vbcast.lane.b32.xlu0 %v677, 256
        %v680 = vpop.permute.xlu0 %679
        %v681 = vlaneseq
        %v682 = vshrl.u32 %v681, 7
        %v683 = vsub.s32 6, %v682
        %v684 = vrot.slane %v466, %v683
        %686 = vbcast.lane.b32.xlu0 %v684, 256
        %v687 = vpop.permute.xlu0 %686
        %v688 = vlaneseq
        %v689 = vshrl.u32 %v688, 7
        %v690 = vsub.s32 7, %v689
        %v691 = vrot.slane %v466, %v690
        %693 = vbcast.lane.b32.xlu0 %v691, 256
        %v694 = vpop.permute.xlu0 %693
        %v727 = vmul.f32 %v462, %v477
        %v728 = vmul.f32 %v462, %v484
        %v729 = vmul.f32 %v462, %v491
        %v730 = vmul.f32 %v462, %v498
        %v731 = vmul.f32 %v462, %v505
        %v732 = vmul.f32 %v462, %v512
        %v733 = vmul.f32 %v462, %v519
        %v734 = vmul.f32 %v462, %v526
        %v735 = vmul.f32 %v462, %v533
        %v736 = vmul.f32 %v462, %v540
        %v737 = vmul.f32 %v462, %v547
        %v738 = vmul.f32 %v462, %v554
        %v739 = vmul.f32 %v462, %v561
        %v740 = vmul.f32 %v462, %v568
        %v741 = vmul.f32 %v462, %v575
        %v742 = vmul.f32 %v462, %v582
        %v743 = vmul.f32 %v462, %v589
        %v744 = vmul.f32 %v462, %v596
        %v745 = vmul.f32 %v462, %v603
        %v746 = vmul.f32 %v462, %v610
        %v747 = vmul.f32 %v462, %v617
        %v748 = vmul.f32 %v462, %v624
        %v749 = vmul.f32 %v462, %v631
        %v750 = vmul.f32 %v462, %v638
        %v751 = vmul.f32 %v462, %v645
        %v752 = vmul.f32 %v462, %v652
        %v753 = vmul.f32 %v462, %v659
        %v754 = vmul.f32 %v462, %v666
        %v755 = vmul.f32 %v462, %v673
        %v756 = vmul.f32 %v462, %v680
        %v757 = vmul.f32 %v462, %v687
        %v758 = vmul.f32 %v462, %v694
        %791 = vset.pattern.permute.xlu0 0
        %792 = vperm.xlu0 %791, %v727
        %v793 = vpop.permute.xlu0 %792
        %794 = vset.pattern.permute.xlu0 0
        %795 = vperm.xlu0 %794, %v728
        %v796 = vpop.permute.xlu0 %795
        %797 = vset.pattern.permute.xlu0 0
        %798 = vperm.xlu0 %797, %v729
        %v799 = vpop.permute.xlu0 %798
        %800 = vset.pattern.permute.xlu0 0
        %801 = vperm.xlu0 %800, %v730
        %v802 = vpop.permute.xlu0 %801
        %803 = vset.pattern.permute.xlu0 0
        %804 = vperm.xlu0 %803, %v731
        %v805 = vpop.permute.xlu0 %804
        %806 = vset.pattern.permute.xlu0 0
        %807 = vperm.xlu0 %806, %v732
        %v808 = vpop.permute.xlu0 %807
        %809 = vset.pattern.permute.xlu0 0
        %810 = vperm.xlu0 %809, %v733
        %v811 = vpop.permute.xlu0 %810
        %812 = vset.pattern.permute.xlu0 0
        %813 = vperm.xlu0 %812, %v734
        %v814 = vpop.permute.xlu0 %813
        %815 = vset.pattern.permute.xlu0 0
        %816 = vperm.xlu0 %815, %v735
        %v817 = vpop.permute.xlu0 %816
        %818 = vset.pattern.permute.xlu0 0
        %819 = vperm.xlu0 %818, %v736
        %v820 = vpop.permute.xlu0 %819
        %821 = vset.pattern.permute.xlu0 0
        %822 = vperm.xlu0 %821, %v737
        %v823 = vpop.permute.xlu0 %822
        %824 = vset.pattern.permute.xlu0 0
        %825 = vperm.xlu0 %824, %v738
        %v826 = vpop.permute.xlu0 %825
        %827 = vset.pattern.permute.xlu0 0
        %828 = vperm.xlu0 %827, %v739
        %v829 = vpop.permute.xlu0 %828
        %830 = vset.pattern.permute.xlu0 0
        %831 = vperm.xlu0 %830, %v740
        %v832 = vpop.permute.xlu0 %831
        %833 = vset.pattern.permute.xlu0 0
        %834 = vperm.xlu0 %833, %v741
        %v835 = vpop.permute.xlu0 %834
        %836 = vset.pattern.permute.xlu0 0
        %837 = vperm.xlu0 %836, %v742
        %v838 = vpop.permute.xlu0 %837
        %839 = vset.pattern.permute.xlu0 0
        %840 = vperm.xlu0 %839, %v743
        %v841 = vpop.permute.xlu0 %840
        %842 = vset.pattern.permute.xlu0 0
        %843 = vperm.xlu0 %842, %v744
        %v844 = vpop.permute.xlu0 %843
        %845 = vset.pattern.permute.xlu0 0
        %846 = vperm.xlu0 %845, %v745
        %v847 = vpop.permute.xlu0 %846
        %848 = vset.pattern.permute.xlu0 0
        %849 = vperm.xlu0 %848, %v746
        %v850 = vpop.permute.xlu0 %849
        %851 = vset.pattern.permute.xlu0 0
        %852 = vperm.xlu0 %851, %v747
        %v853 = vpop.permute.xlu0 %852
        %854 = vset.pattern.permute.xlu0 0
        %855 = vperm.xlu0 %854, %v748
        %v856 = vpop.permute.xlu0 %855
        %857 = vset.pattern.permute.xlu0 0
        %858 = vperm.xlu0 %857, %v749
        %v859 = vpop.permute.xlu0 %858
        %860 = vset.pattern.permute.xlu0 0
        %861 = vperm.xlu0 %860, %v750
        %v862 = vpop.permute.xlu0 %861
        %863 = vset.pattern.permute.xlu0 0
        %864 = vperm.xlu0 %863, %v751
        %v865 = vpop.permute.xlu0 %864
        %866 = vset.pattern.permute.xlu0 0
        %867 = vperm.xlu0 %866, %v752
        %v868 = vpop.permute.xlu0 %867
        %869 = vset.pattern.permute.xlu0 0
        %870 = vperm.xlu0 %869, %v753
        %v871 = vpop.permute.xlu0 %870
        %872 = vset.pattern.permute.xlu0 0
        %873 = vperm.xlu0 %872, %v754
        %v874 = vpop.permute.xlu0 %873
        %875 = vset.pattern.permute.xlu0 0
        %876 = vperm.xlu0 %875, %v755
        %v877 = vpop.permute.xlu0 %876
        %878 = vset.pattern.permute.xlu0 0
        %879 = vperm.xlu0 %878, %v756
        %v880 = vpop.permute.xlu0 %879
        %881 = vset.pattern.permute.xlu0 0
        %882 = vperm.xlu0 %881, %v757
        %v883 = vpop.permute.xlu0 %882
        %884 = vset.pattern.permute.xlu0 0
        %885 = vperm.xlu0 %884, %v758
        %v886 = vpop.permute.xlu0 %885
        %v887 = vlaneseq
        %v888 = vshrl.u32 %v887, 7
        %v889 = vsub.s32 %v399, %v888
        %v890 = vrot.slane %v793, %v889
        %v891 = vlaneseq
        %v892 = vshrl.u32 %v891, 7
        %v893 = vsub.s32 %v399, %v892
        %v894 = vrot.slane %v796, %v893
        %v895 = vlaneseq
        %v896 = vshrl.u32 %v895, 7
        %v897 = vsub.s32 %v399, %v896
        %v898 = vrot.slane %v799, %v897
        %v899 = vlaneseq
        %v900 = vshrl.u32 %v899, 7
        %v901 = vsub.s32 %v399, %v900
        %v902 = vrot.slane %v802, %v901
        %v903 = vlaneseq
        %v904 = vshrl.u32 %v903, 7
        %v905 = vsub.s32 %v399, %v904
        %v906 = vrot.slane %v805, %v905
        %v907 = vlaneseq
        %v908 = vshrl.u32 %v907, 7
        %v909 = vsub.s32 %v399, %v908
        %v910 = vrot.slane %v808, %v909
        %v911 = vlaneseq
        %v912 = vshrl.u32 %v911, 7
        %v913 = vsub.s32 %v399, %v912
        %v914 = vrot.slane %v811, %v913
        %v915 = vlaneseq
        %v916 = vshrl.u32 %v915, 7
        %v917 = vsub.s32 %v399, %v916
        %v918 = vrot.slane %v814, %v917
        %v919 = vlaneseq
        %v920 = vshrl.u32 %v919, 7
        %v921 = vsub.s32 %v399, %v920
        %v922 = vrot.slane %v817, %v921
        %v923 = vlaneseq
        %v924 = vshrl.u32 %v923, 7
        %v925 = vsub.s32 %v399, %v924
        %v926 = vrot.slane %v820, %v925
        %v927 = vlaneseq
        %v928 = vshrl.u32 %v927, 7
        %v929 = vsub.s32 %v399, %v928
        %v930 = vrot.slane %v823, %v929
        %v931 = vlaneseq
        %v932 = vshrl.u32 %v931, 7
        %v933 = vsub.s32 %v399, %v932
        %v934 = vrot.slane %v826, %v933
        %v935 = vlaneseq
        %v936 = vshrl.u32 %v935, 7
        %v937 = vsub.s32 %v399, %v936
        %v938 = vrot.slane %v829, %v937
        %v939 = vlaneseq
        %v940 = vshrl.u32 %v939, 7
        %v941 = vsub.s32 %v399, %v940
        %v942 = vrot.slane %v832, %v941
        %v943 = vlaneseq
        %v944 = vshrl.u32 %v943, 7
        %v945 = vsub.s32 %v399, %v944
        %v946 = vrot.slane %v835, %v945
        %v947 = vlaneseq
        %v948 = vshrl.u32 %v947, 7
        %v949 = vsub.s32 %v399, %v948
        %v950 = vrot.slane %v838, %v949
        %v951 = vlaneseq
        %v952 = vshrl.u32 %v951, 7
        %v953 = vsub.s32 %v399, %v952
        %v954 = vrot.slane %v841, %v953
        %v955 = vlaneseq
        %v956 = vshrl.u32 %v955, 7
        %v957 = vsub.s32 %v399, %v956
        %v958 = vrot.slane %v844, %v957
        %v959 = vlaneseq
        %v960 = vshrl.u32 %v959, 7
        %v961 = vsub.s32 %v399, %v960
        %v962 = vrot.slane %v847, %v961
        %v963 = vlaneseq
        %v964 = vshrl.u32 %v963, 7
        %v965 = vsub.s32 %v399, %v964
        %v966 = vrot.slane %v850, %v965
        %v967 = vlaneseq
        %v968 = vshrl.u32 %v967, 7
        %v969 = vsub.s32 %v399, %v968
        %v970 = vrot.slane %v853, %v969
        %v971 = vlaneseq
        %v972 = vshrl.u32 %v971, 7
        %v973 = vsub.s32 %v399, %v972
        %v974 = vrot.slane %v856, %v973
        %v975 = vlaneseq
        %v976 = vshrl.u32 %v975, 7
        %v977 = vsub.s32 %v399, %v976
        %v978 = vrot.slane %v859, %v977
        %v979 = vlaneseq
        %v980 = vshrl.u32 %v979, 7
        %v981 = vsub.s32 %v399, %v980
        %v982 = vrot.slane %v862, %v981
        %v983 = vlaneseq
        %v984 = vshrl.u32 %v983, 7
        %v985 = vsub.s32 %v399, %v984
        %v986 = vrot.slane %v865, %v985
        %v987 = vlaneseq
        %v988 = vshrl.u32 %v987, 7
        %v989 = vsub.s32 %v399, %v988
        %v990 = vrot.slane %v868, %v989
        %v991 = vlaneseq
        %v992 = vshrl.u32 %v991, 7
        %v993 = vsub.s32 %v399, %v992
        %v994 = vrot.slane %v871, %v993
        %v995 = vlaneseq
        %v996 = vshrl.u32 %v995, 7
        %v997 = vsub.s32 %v399, %v996
        %v998 = vrot.slane %v874, %v997
        %v999 = vlaneseq
        %v1000 = vshrl.u32 %v999, 7
        %v1001 = vsub.s32 %v399, %v1000
        %v1002 = vrot.slane %v877, %v1001
        %v1003 = vlaneseq
        %v1004 = vshrl.u32 %v1003, 7
        %v1005 = vsub.s32 %v399, %v1004
        %v1006 = vrot.slane %v880, %v1005
        %v1007 = vlaneseq
        %v1008 = vshrl.u32 %v1007, 7
        %v1009 = vsub.s32 %v399, %v1008
        %v1010 = vrot.slane %v883, %v1009
        %v1011 = vlaneseq
        %v1012 = vshrl.u32 %v1011, 7
        %v1013 = vsub.s32 %v399, %v1012
        %v1014 = vrot.slane %v886, %v1013
        %v1015 = vsel %vm444, %v894, %v890
        %vm1016 = vcmask 1042434
        %v1017 = vsel %vm1016, %v898, %v1015
        %vm1018 = vcmask 1043459
        %v1019 = vsel %vm1018, %v902, %v1017
        %vm1020 = vcmask 1044484
        %v1021 = vsel %vm1020, %v906, %v1019
        %vm1022 = vcmask 1045509
        %v1023 = vsel %vm1022, %v910, %v1021
        %vm1024 = vcmask 1046534
        %v1025 = vsel %vm1024, %v914, %v1023
        %vm1026 = vcmask 1047559
        %v1027 = vsel %vm1026, %v918, %v1025
        %v1028 = vsel %vm444, %v926, %v922
        %v1029 = vsel %vm1016, %v930, %v1028
        %v1030 = vsel %vm1018, %v934, %v1029
        %v1031 = vsel %vm1020, %v938, %v1030
        %v1032 = vsel %vm1022, %v942, %v1031
        %v1033 = vsel %vm1024, %v946, %v1032
        %v1034 = vsel %vm1026, %v950, %v1033
        %v1035 = vsel %vm444, %v958, %v954
        %v1036 = vsel %vm1016, %v962, %v1035
        %v1037 = vsel %vm1018, %v966, %v1036
        %v1038 = vsel %vm1020, %v970, %v1037
        %v1039 = vsel %vm1022, %v974, %v1038
        %v1040 = vsel %vm1024, %v978, %v1039
        %v1041 = vsel %vm1026, %v982, %v1040
        %v1042 = vsel %vm444, %v990, %v986
        %v1043 = vsel %vm1016, %v994, %v1042
        %v1044 = vsel %vm1018, %v998, %v1043
        %v1045 = vsel %vm1020, %v1002, %v1044
        %v1046 = vsel %vm1022, %v1006, %v1045
        %v1047 = vsel %vm1024, %v1010, %v1046
        %v1048 = vsel %vm1026, %v1014, %v1047
        %vm1053 = vcmask 15360
        %v1054 = vsel %vm1053, %v1027, 0.0
        %1055 = vadd.xlane.f32.xlu0 %v1054
        %v1056 = vpop.xlane.xlu0 %1055
        %v1057 = vsel %vm1053, %v1034, 0.0
        %1058 = vadd.xlane.f32.xlu0 %v1057
        %v1059 = vpop.xlane.xlu0 %1058
        %v1060 = vsel %vm1053, %v1041, 0.0
        %1061 = vadd.xlane.f32.xlu0 %v1060
        %v1062 = vpop.xlane.xlu0 %1061
        %v1063 = vsel %vm1053, %v1048, 0.0
        %1064 = vadd.xlane.f32.xlu0 %v1063
        %v1065 = vpop.xlane.xlu0 %1064
        %v1066 = vld [vmem:[%s4] sm:$0x1]
        %v1068 = vlaneseq
        %v1069 = vshrl.u32 %v1068, 7
        %v1070 = vsub.s32 0, %v1069
        %v1071 = vrot.slane %v1066, %v1070
        %1073 = vbcast.lane.b32.xlu0 %v1071, 256
        %v1074 = vpop.permute.xlu0 %1073
        %s1076 = sor.u32 256, 8
        %1077 = vbcast.lane.b32.xlu0 %v1071, %s1076
        %v1078 = vpop.permute.xlu0 %1077
        %s1080 = sor.u32 256, 16
        %1081 = vbcast.lane.b32.xlu0 %v1071, %s1080
        %v1082 = vpop.permute.xlu0 %1081
        %s1084 = sor.u32 256, 24
        %1085 = vbcast.lane.b32.xlu0 %v1071, %s1084
        %v1086 = vpop.permute.xlu0 %1085
        %v1091 = vadd.f32 %v1056, %v1074
        %v1092 = vadd.f32 %v1059, %v1078
        %v1093 = vadd.f32 %v1062, %v1082
        %v1094 = vadd.f32 %v1065, %v1086
        %v1095 = vxor.u32 %v1091, 2147483648
        %v1096 = vxor.u32 %v1092, 2147483648
        %v1097 = vxor.u32 %v1093, 2147483648
        %v1098 = vxor.u32 %v1094, 2147483648
        %v1099 = vmul.f32 %v1095, 1.442695
        %v1100 = vpow.pop %v1099
        %v1101 = vmul.f32 %v1096, 1.442695
        %v1102 = vpow.pop %v1101
        %v1103 = vmul.f32 %v1097, 1.442695
        %v1104 = vpow.pop %v1103
        %v1105 = vmul.f32 %v1098, 1.442695
        %v1106 = vpow.pop %v1105
        %v1107 = vadd.f32 %v1100, 1.0
        %v1108 = vadd.f32 %v1102, 1.0
        %v1109 = vadd.f32 %v1104, 1.0
        %v1110 = vadd.f32 %v1106, 1.0
        %v1111 = vrcp.pop %v1107
        %v1112 = vmul.f32 1.0, %v1111
        %v1113 = vrcp.pop %v1108
        %v1114 = vmul.f32 1.0, %v1113
        %v1115 = vrcp.pop %v1109
        %v1116 = vmul.f32 1.0, %v1115
        %v1117 = vrcp.pop %v1110
        %v1118 = vmul.f32 1.0, %v1117
        %v1119 = vld [vmem:[%s5] sm:$0xff]
        %v1120 = vld [vmem:[%s5 + $0x8] sm:$0xff]
        %v1121 = vld [vmem:[%s5 + $0x10] sm:$0xff]
        %v1122 = vld [vmem:[%s5 + $0x18] sm:$0xff]
        %1124 = vset.pattern.permute.xlu0 0
        %1125 = vperm.xlu0 %1124, %v1119
        %v1126 = vpop.permute.xlu0 %1125
        %1129 = vset.pattern.permute.xlu0 0
        %1130 = vperm.xlu0 %1129, %v1120
        %v1131 = vpop.permute.xlu0 %1130
        %1134 = vset.pattern.permute.xlu0 0
        %1135 = vperm.xlu0 %1134, %v1121
        %v1136 = vpop.permute.xlu0 %1135
        %1139 = vset.pattern.permute.xlu0 0
        %1140 = vperm.xlu0 %1139, %v1122
        %v1141 = vpop.permute.xlu0 %1140
        %v1143 = vmul.f32 %v270, %v1126
        %v1144 = vmul.f32 %v271, %v1126
        %v1145 = vmul.f32 %v272, %v1126
        %v1146 = vmul.f32 %v273, %v1126
        %v1147 = vmul.f32 %v274, %v1131
        %v1148 = vmul.f32 %v275, %v1131
        %v1149 = vmul.f32 %v276, %v1131
        %v1150 = vmul.f32 %v277, %v1131
        %v1151 = vmul.f32 %v278, %v1136
        %v1152 = vmul.f32 %v279, %v1136
        %v1153 = vmul.f32 %v280, %v1136
        %v1154 = vmul.f32 %v281, %v1136
        %v1155 = vmul.f32 %v282, %v1141
        %v1156 = vmul.f32 %v283, %v1141
        %v1157 = vmul.f32 %v284, %v1141
        %v1158 = vmul.f32 %v285, %v1141
        %v1159 = vadd.f32 %v1143, %v1147
        %v1160 = vadd.f32 %v1159, %v1151
        %v1161 = vadd.f32 %v1160, %v1155
        %v1162 = vrot.slane %v1161, 4
        %v1163 = vadd.f32 %v1161, %v1162
        %v1164 = vrot.slane %v1163, 2
        %v1165 = vadd.f32 %v1163, %v1164
        %v1166 = vrot.slane %v1165, 1
        %v1167 = vadd.f32 %v1165, %v1166
        %v1168 = vadd.f32 %v1144, %v1148
        %v1169 = vadd.f32 %v1168, %v1152
        %v1170 = vadd.f32 %v1169, %v1156
        %v1171 = vrot.slane %v1170, 4
        %v1172 = vadd.f32 %v1170, %v1171
        %v1173 = vrot.slane %v1172, 2
        %v1174 = vadd.f32 %v1172, %v1173
        %v1175 = vrot.slane %v1174, 1
        %v1176 = vadd.f32 %v1174, %v1175
        %v1177 = vadd.f32 %v1145, %v1149
        %v1178 = vadd.f32 %v1177, %v1153
        %v1179 = vadd.f32 %v1178, %v1157
        %v1180 = vrot.slane %v1179, 4
        %v1181 = vadd.f32 %v1179, %v1180
        %v1182 = vrot.slane %v1181, 2
        %v1183 = vadd.f32 %v1181, %v1182
        %v1184 = vrot.slane %v1183, 1
        %v1185 = vadd.f32 %v1183, %v1184
        %v1186 = vadd.f32 %v1146, %v1150
        %v1187 = vadd.f32 %v1186, %v1154
        %v1188 = vadd.f32 %v1187, %v1158
        %v1189 = vrot.slane %v1188, 4
        %v1190 = vadd.f32 %v1188, %v1189
        %v1191 = vrot.slane %v1190, 2
        %v1192 = vadd.f32 %v1190, %v1191
        %v1193 = vrot.slane %v1192, 1
        %v1194 = vadd.f32 %v1192, %v1193
        %v1195 = vxor.u32 %v1167, 2147483648
        %v1196 = vxor.u32 %v1176, 2147483648
        %v1197 = vxor.u32 %v1185, 2147483648
        %v1198 = vxor.u32 %v1194, 2147483648
        %v1199 = vmul.f32 %v1195, 1.442695
        %v1200 = vpow.pop %v1199
        %v1201 = vmul.f32 %v1196, 1.442695
        %v1202 = vpow.pop %v1201
        %v1203 = vmul.f32 %v1197, 1.442695
        %v1204 = vpow.pop %v1203
        %v1205 = vmul.f32 %v1198, 1.442695
        %v1206 = vpow.pop %v1205
        %v1207 = vadd.f32 %v1200, 1.0
        %v1208 = vadd.f32 %v1202, 1.0
        %v1209 = vadd.f32 %v1204, 1.0
        %v1210 = vadd.f32 %v1206, 1.0
        %v1211 = vrcp.pop %v1207
        %v1212 = vmul.f32 1.0, %v1211
        %v1213 = vrcp.pop %v1208
        %v1214 = vmul.f32 1.0, %v1213
        %v1215 = vrcp.pop %v1209
        %v1216 = vmul.f32 1.0, %v1215
        %v1217 = vrcp.pop %v1210
        %v1218 = vmul.f32 1.0, %v1217
        %v1219 = vadd.f32 %v1212, 1.0
        %v1220 = vadd.f32 %v1214, 1.0
        %v1221 = vadd.f32 %v1216, 1.0
        %v1222 = vadd.f32 %v1218, 1.0
        %1224 = vset.pattern.permute.xlu0 0
        %1225 = vperm.xlu0 %1224, %v1112
        %v1226 = vpop.permute.xlu0 %1225
        %1229 = vset.pattern.permute.xlu0 0
        %1230 = vperm.xlu0 %1229, %v1114
        %v1231 = vpop.permute.xlu0 %1230
        %1234 = vset.pattern.permute.xlu0 0
        %1235 = vperm.xlu0 %1234, %v1116
        %v1236 = vpop.permute.xlu0 %1235
        %1239 = vset.pattern.permute.xlu0 0
        %1240 = vperm.xlu0 %1239, %v1118
        %v1241 = vpop.permute.xlu0 %1240
        %v1243 = vadd.f32 %v1219, %v1226
        %v1244 = vadd.f32 %v1220, %v1226
        %v1245 = vadd.f32 %v1221, %v1226
        %v1246 = vadd.f32 %v1222, %v1226
        %v1247 = vadd.f32 %v1219, %v1231
        %v1248 = vadd.f32 %v1220, %v1231
        %v1249 = vadd.f32 %v1221, %v1231
        %v1250 = vadd.f32 %v1222, %v1231
        %v1251 = vadd.f32 %v1219, %v1236
        %v1252 = vadd.f32 %v1220, %v1236
        %v1253 = vadd.f32 %v1221, %v1236
        %v1254 = vadd.f32 %v1222, %v1236
        %v1255 = vadd.f32 %v1219, %v1241
        %v1256 = vadd.f32 %v1220, %v1241
        %v1257 = vadd.f32 %v1221, %v1241
        %v1258 = vadd.f32 %v1222, %v1241
        %v1259 = vmul.f32 %v270, %v1243
        %v1260 = vmul.f32 %v271, %v1244
        %v1261 = vmul.f32 %v272, %v1245
        %v1262 = vmul.f32 %v273, %v1246
        %v1263 = vmul.f32 %v274, %v1247
        %v1264 = vmul.f32 %v275, %v1248
        %v1265 = vmul.f32 %v276, %v1249
        %v1266 = vmul.f32 %v277, %v1250
        %v1267 = vmul.f32 %v278, %v1251
        %v1268 = vmul.f32 %v279, %v1252
        %v1269 = vmul.f32 %v280, %v1253
        %v1270 = vmul.f32 %v281, %v1254
        %v1271 = vmul.f32 %v282, %v1255
        %v1272 = vmul.f32 %v283, %v1256
        %v1273 = vmul.f32 %v284, %v1257
        %v1274 = vmul.f32 %v285, %v1258
        %1275 = vst [vmem:[%s269] sm:$0xff] %v1259
        %1276 = vst [vmem:[%s269 + $0x8] sm:$0xff] %v1260
        %1277 = vst [vmem:[%s269 + $0x10] sm:$0xff] %v1261
        %1278 = vst [vmem:[%s269 + $0x18] sm:$0xff] %v1262
        %1279 = vst [vmem:[%s269 + $0x20] sm:$0xff] %v1263
        %1280 = vst [vmem:[%s269 + $0x28] sm:$0xff] %v1264
        %1281 = vst [vmem:[%s269 + $0x30] sm:$0xff] %v1265
        %1282 = vst [vmem:[%s269 + $0x38] sm:$0xff] %v1266
        %1283 = vst [vmem:[%s269 + $0x40] sm:$0xff] %v1267
        %1284 = vst [vmem:[%s269 + $0x48] sm:$0xff] %v1268
        %1285 = vst [vmem:[%s269 + $0x50] sm:$0xff] %v1269
        %1286 = vst [vmem:[%s269 + $0x58] sm:$0xff] %v1270
        %1287 = vst [vmem:[%s269 + $0x60] sm:$0xff] %v1271
        %1288 = vst [vmem:[%s269 + $0x68] sm:$0xff] %v1272
        %1289 = vst [vmem:[%s269 + $0x70] sm:$0xff] %v1273
        %1290 = vst [vmem:[%s269 + $0x78] sm:$0xff] %v1274
        %s1291 = sand.u32 %s162, 1
        %s1292 = scalar_lea.sflag [#allocation4], %s1291
        %s1293 = sand.u32 %s162, 1
        %s1294 = smul.addr %s1293, 128
        %s1295 = scalar_lea.vmem [#allocation5], %s1294
        // Predicated region
        $region49: #{tpu_custom_call.1} parent=43 // pred_check
          %p1296 = pneg %p172
        $region50: #{tpu_custom_call.1} parent=43 // pred_check_branch
          %1298 = sbr.rel (%p1296) target = $region52
        $region51: #{tpu_custom_call.1} parent=43 // pred_region
          %s1300 = ssub.s32 2048, 2048
          %1301 = vsyncadd %s1292, %s1300
          %s1302 = smul.addr %s23, 16
          %s1303 = smul.addr %s1302, 128
          %s1304 = scalar_lea.hbm %s6, %s1303
          %s1305 = sshll.u32 %s1295, 4
          %s1306 = int_to_ptr.vmem [resolvable:$true] %s1305
          %1311 = dma.vmem_to_hbm [thread:$0]  %s1306, 2048, %s1304, %s1292, 512, 512, 32
        $region52: #{tpu_custom_call.1} parent=43 // pred_fallthru
          _
      $region44: #{tpu_custom_call.1} parent=5 // pred_fallthru
        _
      %p1312 = scmp.le.s32.totalorder 2, %s18
      // Predicated region
      $region53: #{tpu_custom_call.1} parent=5 // pred_check
        %p1313 = pneg %p1312
      $region54: #{tpu_custom_call.1} parent=5 // pred_check_branch
        %1315 = sbr.rel (%p1313) target = $region56
      $region55: #{tpu_custom_call.1} parent=5 // pred_region
        %s1316 = ssub.s32 %s18, 2
        // Predicated region
        $region57: #{tpu_custom_call.1} parent=55 // pred_check
          %p1317 = pneg %p178
        $region58: #{tpu_custom_call.1} parent=55 // pred_check_branch
          %1319 = sbr.rel (%p1317) target = $region60
        $region59: #{tpu_custom_call.1} parent=55 // pred_region
          %s1320 = sand.u32 %s163, 1
          %s1321 = scalar_lea.sflag [#allocation4], %s1320
          %s1322 = sand.u32 %s163, 1
          %s1323 = smul.addr %s1322, 128
          %s1324 = scalar_lea.vmem [#allocation5], %s1323
          %1325 = dma.done %s1321, 2048
        $region60: #{tpu_custom_call.1} parent=55 // pred_fallthru
          _
      $region56: #{tpu_custom_call.1} parent=5 // pred_fallthru
        _
    $region6: #{tpu_custom_call.1} parent=1 // loop_footer
      %s22 = sadd.s32 1, %s18
    $region7: #{tpu_custom_call.1} parent=1 // loop_footer_branch
      %17 = sbr.rel target = $region3
    $region8: #{tpu_custom_call.1} parent=1 // loop_exit
      _
    %1326 = vsyncpa [#allocation3], 1
    %s1327 = scalar_lea.sflag [#allocation3], 1
    %1328 = vsyncpa %s1327, 1
    %1329 = vsyncpa [#allocation4], 1
    %s1330 = scalar_lea.sflag [#allocation4], 1
    %1331 = vsyncpa %s1330, 1

</llo_original>
